<compile_context>
chip_gen: v7x
topology: tpu7x:2x2x1
jax: 0.10.0
libtpu: 0.0.40
codegen_flags: <defaults>
</compile_context>

<pallas_src>
import jax
import jax.numpy as jnp
from jax import lax
from jax.experimental import pallas as pl
from jax.experimental.pallas import tpu as pltpu


_BUDGET_BYTES = 4 * 1024 * 1024          # target HBM traffic per buffer per grid step
_CHUNK_C = 32                            # sublane chunk for the low-precision reduction


def _make_normalize_kernel(power, c, chunk_c):
    """Kernel factory. Block shape is (Nb, C, T); reduce over axis=1 (channels)."""

    def normalize_kernel(x_ref, o_ref):
        if power == 2 and chunk_c is not None:
            # Chunked square-sum: cast C-chunks to f32 transiently instead of holding a
            # full (Nb, C, T) f32 copy of a bf16/fp8 tile live across the reduction.
            nb, _, t = x_ref.shape
            n_chunks = c // chunk_c
            s = jnp.zeros((nb, 1, t), jnp.float32)
            for ci in range(n_chunks):
                xc = x_ref[:, ci * chunk_c:(ci + 1) * chunk_c, :].astype(jnp.float32)
                s = s + jnp.sum(xc * xc, axis=1, keepdims=True)
            inv = lax.rsqrt(s)                                   # one EUP op per column
            for ci in range(n_chunks):
                xc = x_ref[:, ci * chunk_c:(ci + 1) * chunk_c, :].astype(jnp.float32)
                o_ref[:, ci * chunk_c:(ci + 1) * chunk_c, :] = (xc * inv).astype(o_ref.dtype)
            return

        x = x_ref[...]
        xf = x.astype(jnp.float32)
        if power == 2:
            s = jnp.sum(xf * xf, axis=1, keepdims=True)          # (Nb, 1, T) f32
            inv = lax.rsqrt(s)                                   # EUP, ~free slot
        else:
            if isinstance(power, int) and power >= 1:
                # Repeated VPU multiplies instead of an elementwise pow (single-slot EUP).
                xp = xf
                for _ in range(power - 1):
                    xp = xp * xf
            else:
                xp = jnp.power(xf, power)
            s = jnp.sum(xp, axis=1, keepdims=True)
            inv = jnp.power(s, -1.0 / power)                     # per-column root only
        # Multiply in f32 and cast once (better bf16 precision than rounding `inv` first).
        o_ref[...] = (xf * inv).astype(o_ref.dtype)

    return normalize_kernel


def _choose_tiles(n, c, hw, itemsize, budget_bytes):
    """Pick (Nb, T): batch-rows per block and lane tile, targeting `budget_bytes`/buffer."""
    per_col = c * itemsize                       # bytes of one lane column of the block
    per_sample = per_col * hw                    # bytes of one full (C, HW) sample

    if per_sample <= budget_bytes:
        # Whole HW fits in one block; batch samples along N to fill the budget.
        t = hw
        nb = max(1, min(n, budget_bytes // per_sample))
        # Keep >=2 grid steps when the data is big enough for megacore sharding to matter.
        if nb >= n and n >= 2 and n * per_sample >= (2 << 20):
            nb = pl.cdiv(n, 2)
        return int(nb), int(t)

    # Tile along the lane (HW) axis; block spans full C, one sample per step.
    padded_hw = pl.cdiv(hw, 128) * 128
    t_budget = max(128, (budget_bytes // per_col) // 128 * 128)
    # Keep each strided row chunk >= ~2 KiB (T >= 512 f32 / 1024 bf16) for full DMA BW.
    min_lanes = max(128, pl.cdiv(2048 // itemsize, 128) * 128)
    t = min(max(t_budget, min_lanes), padded_hw)
    if t >= hw:
        t = hw                                   # full dim (exempt from 128-divisibility)
    return 1, int(t)


def normalize(x: jax.Array, power: int = 2, *, block_budget_bytes: int = _BUDGET_BYTES) -> jax.Array:
    """Lp-normalize over dim 1 of an NCHW tensor, matching the PyTorch module (no eps)."""
    N, C, H, W = x.shape
    HW = H * W
    x3 = x.reshape(N, C, HW)                     # pure view
    itemsize = jnp.dtype(x.dtype).itemsize

    # Chunked reduction only pays off for narrow dtypes with a reasonably large C.
    chunk_c = _CHUNK_C if (power == 2 and x.dtype != jnp.float32
                           and C >= 2 * _CHUNK_C and C % _CHUNK_C == 0) else None

    budget = block_budget_bytes
    if itemsize < 4 and chunk_c is None:
        budget = max(budget // 2, 256 * 1024)    # direct path keeps a full f32 tile live

    Nb, T = _choose_tiles(N, C, HW, itemsize, budget)
    grid = (pl.cdiv(N, Nb), pl.cdiv(HW, T))

    # vmem limit derived from the real footprint: in+out x double-buffering + f32 temps.
    block_elems = Nb * C * T
    block_bytes = block_elems * itemsize
    if chunk_c is not None:
        f32_temp = 2 * Nb * chunk_c * T * 4 + Nb * T * 8
    else:
        f32_temp = 2 * block_elems * 4
    footprint = 4 * block_bytes + f32_temp
    vmem_limit = int(min(max(footprint * 3 // 2 + (2 << 20), 16 << 20), 64 << 20))

    cost = pl.CostEstimate(
        flops=3 * N * C * HW,
        bytes_accessed=2 * N * C * HW * itemsize,
        transcendentals=N * HW,
    )

    out3 = pl.pallas_call(
        _make_normalize_kernel(power, C, chunk_c),
        out_shape=jax.ShapeDtypeStruct((N, C, HW), x.dtype),
        grid_spec=pltpu.PrefetchScalarGridSpec(
            num_scalar_prefetch=0,
            grid=grid,
            in_specs=[pl.BlockSpec((Nb, C, T), lambda n, t: (n, 0, t))],
            out_specs=pl.BlockSpec((Nb, C, T), lambda n, t: (n, 0, t)),
        ),
        compiler_params=pltpu.CompilerParams(
            dimension_semantics=("parallel", "parallel"),
            vmem_limit_bytes=vmem_limit,
        ),
        cost_estimate=cost,
    )(x3)

    return out3.reshape(N, C, H, W)


def _ref_normalize(x, power=2):
    xf = x.astype(jnp.float32)
    norm = jnp.power(jnp.sum(jnp.power(xf, power), axis=1, keepdims=True), 1.0 / power)
    return xf / norm


if __name__ == "__main__":
    key = jax.random.PRNGKey(0)
    k1, k2, k3 = jax.random.split(key, 3)

    # 1) Primary case: small NCHW feature map, f32 (matches module defaults).
    x = jax.random.normal(k1, (2, 4, 16, 16), dtype=jnp.float32)
    out = jax.block_until_ready(normalize(x, power=2))
    ref = _ref_normalize(x)
    assert out.shape == x.shape and out.dtype == x.dtype
    assert jnp.allclose(out, ref, atol=1e-5, rtol=1e-5)

    # 2) bf16 with larger C: exercises the chunked (no full f32 tile) reduction path.
    xb = jax.random.normal(k2, (2, 64, 16, 16), dtype=jnp.float32).astype(jnp.bfloat16)
    outb = jax.block_until_ready(normalize(xb, power=2))
    refb = _ref_normalize(xb)
    assert outb.dtype == xb.dtype
    assert jnp.allclose(outb.astype(jnp.float32), refb, atol=2e-2, rtol=2e-2)

    # 3) Non-128-multiple HW (56x56=3136) with a small forced budget: exercises the
    #    cdiv lane tiling with a masked/padded tail block.
    xc = jax.random.normal(k3, (2, 64, 56, 56), dtype=jnp.float32)
    outc = jax.block_until_ready(normalize(xc, power=2, block_budget_bytes=256 * 1024))
    refc = _ref_normalize(xc)
    assert jnp.allclose(outc, refc, atol=1e-5, rtol=1e-5)

    print("KERNEL_OK")
</pallas_src>

<mosaic_0001>
module attributes {stable_mosaic.version = 11 : i64} {
  func.func @normalize_kernel(%arg0: i32, %arg1: i32, %arg2: memref<2x4x256xf32, #tpu.memory_space<vmem>>, %arg3: memref<2x4x256xf32, #tpu.memory_space<vmem>>) attributes {dimension_semantics = [#tpu.dimension_semantics<parallel>, #tpu.dimension_semantics<parallel>], iteration_bounds = array<i64: 1, 1>, scalar_prefetch = 0 : i64, scratch_operands = 0 : i64, tpu.core_type = #tpu.core_type<tc>, window_params = [{transform_indices = @transform_0, window_bounds = array<i64: 2, 4, 256>}, {transform_indices = @transform_1, window_bounds = array<i64: 2, 4, 256>}]} {
    %c0 = arith.constant 0 : index
    %c0_0 = arith.constant 0 : index
    %c0_1 = arith.constant 0 : index
    %0 = vector.load %arg2[%c0, %c0_0, %c0_1] : memref<2x4x256xf32, #tpu.memory_space<vmem>>, vector<2x4x256xf32>
    %1 = arith.mulf %0, %0 : vector<2x4x256xf32>
    %cst = arith.constant dense<0.000000e+00> : vector<2x256xf32>
    %2 = vector.multi_reduction <add>, %1, %cst [1] : vector<2x4x256xf32> to vector<2x256xf32>
    %3 = vector.shape_cast %2 : vector<2x256xf32> to vector<2x1x256xf32>
    %4 = math.rsqrt %3 : vector<2x1x256xf32>
    %5 = vector.broadcast %4 : vector<2x1x256xf32> to vector<2x4x256xf32>
    %6 = arith.mulf %0, %5 : vector<2x4x256xf32>
    %c0_2 = arith.constant 0 : index
    %c0_3 = arith.constant 0 : index
    %c0_4 = arith.constant 0 : index
    %7 = vector.load %arg3[%c0_2, %c0_3, %c0_4] : memref<2x4x256xf32, #tpu.memory_space<vmem>>, vector<2x4x256xf32>
    tpu.vector_store %arg3[%c0_2, %c0_3, %c0_4], %6 {strides = array<i32>} : memref<2x4x256xf32, #tpu.memory_space<vmem>>, vector<2x4x256xf32>,
    return
  }
  func.func @transform_0(%arg0: i32, %arg1: i32) -> (i32, i32, i32) {
    %c0_i32 = arith.constant 0 : i32
    %c0_i32_0 = arith.constant 0 : i32
    return %arg0, %c0_i32, %arg1 : i32, i32, i32
  }
  func.func @transform_1(%arg0: i32, %arg1: i32) -> (i32, i32, i32) {
    %c0_i32 = arith.constant 0 : i32
    %c0_i32_0 = arith.constant 0 : i32
    return %arg0, %c0_i32, %arg1 : i32, i32, i32
  }
}

</mosaic_0001>

<llo_original>
// kernel: tpu_custom_call.1
$region0: #{tpu_custom_call.1}
  #allocation0 [shape = 'u32[]', space=smem, size = 0x4, offset = 0x4, fixed_abs, tag = 'smem constant byte address 0x4 - core index']
  #allocation1 [shape = 'u32[144,128]{1,0:T(1,128)}', space=vmem, size = 0x12000, scoped, tag = 'internal scratch']
  %s0 = inlined_call_operand.hbm [shape: f32[2,4,256], index: 0, kind: input, shape index: {}]
  %s1 = inlined_call_operand.hbm [shape: f32[2,4,256], index: 1, kind: output, shape index: {}]
  %s2 = sld [smem:[#allocation0]]
  $region18: #{tpu_custom_call.1} parent=0
    _
  %s4 = ssub.s32 1, %s2
  %s5 = scalar_select 0, %s4, %s2
  $region1: #{tpu_custom_call.1} parent=0
    #allocation2 [shape = 'u8[8192]{0}', space=vmem, size = 0x2000, scoped, tag = 'input window, operand 0, single buffered']
    #allocation3 [shape = 's32[1]{0}', space=sflag, size = 0x4, scoped, tag = 'scoped memory for tpu_custom_call.1']
    #allocation4 [shape = 's32[1]{0}', space=sflag, size = 0x4, scoped, tag = 'scoped memory for tpu_custom_call.1']
    #allocation5 [shape = 'u8[8192]{0}', space=vmem, size = 0x2000, scoped, tag = 'output window, operand 0, single buffered']
    %6 = vsyncpa [#allocation3], 0
    %7 = vsyncpa [#allocation4], 0
    // Predicated region
    $region2: #{tpu_custom_call.1} parent=1 // pred_check
      _
    $region3: #{tpu_custom_call.1} parent=1 // pred_check_branch
      %9 = sbr.rel (0) target = $region5
    $region4: #{tpu_custom_call.1} parent=1 // pred_region
      %s11 = ssub.s32 256, 256
      %12 = vsyncadd [#allocation3], %s11
      %s13 = sshll.u32 [#allocation2], 4
      %s14 = int_to_ptr.vmem [resolvable:$true] %s13
      %19 = dma.hbm_to_vmem [thread:$0]  %s0, 256, %s14, [#allocation3], 128, 128, 8
    $region5: #{tpu_custom_call.1} parent=1 // pred_fallthru
      _
    // Predicated region
    $region6: #{tpu_custom_call.1} parent=1 // pred_check
      _
    $region7: #{tpu_custom_call.1} parent=1 // pred_check_branch
      %21 = sbr.rel (0) target = $region9
    $region8: #{tpu_custom_call.1} parent=1 // pred_region
      %22 = dma.done [#allocation3], 256
    $region9: #{tpu_custom_call.1} parent=1 // pred_fallthru
      _
    %v23 = vld [vmem:[#allocation2] sm:$0xff]
    %v24 = vld [vmem:[#allocation2 + $0x8] sm:$0xff]
    %v25 = vmul.f32 %v23, %v23
    %v26 = vmul.f32 %v24, %v24
    %v29 = vcombine.high %v25, %v25
    %v30 = vcombine.high %v26, %v26
    %vm33 = vcmask 1043456
    %v34 = vsel %vm33, %v25, 0.0
    %v35 = vrot.slane %v34, 4
    %v36 = vadd.f32 %v34, %v35
    %v37 = vrot.slane %v36, 2
    %v38 = vadd.f32 %v36, %v37
    %v39 = vrot.slane %v38, 1
    %v40 = vadd.f32 %v38, %v39
    %v41 = vsel %vm33, %v29, 0.0
    %v42 = vrot.slane %v41, 4
    %v43 = vadd.f32 %v41, %v42
    %v44 = vrot.slane %v43, 2
    %v45 = vadd.f32 %v43, %v44
    %v46 = vrot.slane %v45, 1
    %v47 = vadd.f32 %v45, %v46
    %v48 = vsel %vm33, %v26, 0.0
    %v49 = vrot.slane %v48, 4
    %v50 = vadd.f32 %v48, %v49
    %v51 = vrot.slane %v50, 2
    %v52 = vadd.f32 %v50, %v51
    %v53 = vrot.slane %v52, 1
    %v54 = vadd.f32 %v52, %v53
    %v55 = vsel %vm33, %v30, 0.0
    %v56 = vrot.slane %v55, 4
    %v57 = vadd.f32 %v55, %v56
    %v58 = vrot.slane %v57, 2
    %v59 = vadd.f32 %v57, %v58
    %v60 = vrot.slane %v59, 1
    %v61 = vadd.f32 %v59, %v60
    %v62 = vrsqrt.pop %v40
    %v63 = vrsqrt.pop %v47
    %v64 = vrsqrt.pop %v54
    %v65 = vrsqrt.pop %v61
    %v70 = vcombine.low %v62, %v63
    %v71 = vcombine.low %v64, %v65
    %v74 = vmul.f32 %v23, %v70
    %v75 = vmul.f32 %v24, %v71
    %76 = vst [vmem:[#allocation5] sm:$0xff] %v74
    %77 = vst [vmem:[#allocation5 + $0x8] sm:$0xff] %v75
    // Predicated region
    $region10: #{tpu_custom_call.1} parent=1 // pred_check
      _
    $region11: #{tpu_custom_call.1} parent=1 // pred_check_branch
      %79 = sbr.rel (0) target = $region13
    $region12: #{tpu_custom_call.1} parent=1 // pred_region
      %s81 = ssub.s32 256, 256
      %82 = vsyncadd [#allocation4], %s81
      %s83 = sshll.u32 [#allocation5], 4
      %s84 = int_to_ptr.vmem [resolvable:$true] %s83
      %89 = dma.vmem_to_hbm [thread:$0]  %s84, 256, %s1, [#allocation4], 128, 128, 8
    $region13: #{tpu_custom_call.1} parent=1 // pred_fallthru
      _
    // Predicated region
    $region14: #{tpu_custom_call.1} parent=1 // pred_check
      _
    $region15: #{tpu_custom_call.1} parent=1 // pred_check_branch
      %91 = sbr.rel (0) target = $region17
    $region16: #{tpu_custom_call.1} parent=1 // pred_region
      %92 = dma.done [#allocation4], 256
    $region17: #{tpu_custom_call.1} parent=1 // pred_fallthru
      _
    %93 = vsyncpa [#allocation3], 1
    %94 = vsyncpa [#allocation4], 1

</llo_original>
